<compile_context>
chip_gen: v5e
topology: v5e:2x2
jax: 0.10.0
libtpu: 0.0.40
codegen_flags: <defaults>
</compile_context>

<pallas_src>
import functools

import jax
import jax.numpy as jnp
from jax.experimental import pallas as pl
from jax.experimental.pallas import tpu as pltpu

LANE = 128
SUBLANE = 8
TM_MAX = 2048  # rows per grid step (f32: 1 MiB per input block)


def _round_up(v, m):
    return (v + m - 1) // m * m


def _l1_sum_kernel(x_ref, y_ref, out_ref, acc_ref, *, tm, rows):
    """Accumulate sum(|x - y|) over (tm, 128) row tiles; scalar out at the end."""
    i = pl.program_id(0)

    @pl.when(i == 0)
    def _():
        acc_ref[...] = jnp.zeros_like(acc_ref)

    diff = x_ref[...].astype(jnp.float32) - y_ref[...].astype(jnp.float32)
    absdiff = jnp.abs(diff)

    if rows % tm != 0:
        # The last block extends past the array; rows beyond `rows` are garbage.
        # Mask them with iota-based predication (pure VPU, cheap in a mem-bound
        # kernel). This branch is resolved statically at trace time.
        valid = rows - i * tm  # >= tm for every step except the last
        rowid = jax.lax.broadcasted_iota(jnp.int32, absdiff.shape, 0)
        absdiff = jnp.where(rowid < valid, absdiff, 0.0)

    # Keep the hot loop on the VPU: fold the tile into one (8, 128) vreg partial.
    acc_ref[...] += jnp.sum(
        absdiff.reshape(tm // SUBLANE, SUBLANE, LANE), axis=0
    )

    @pl.when(i == pl.num_programs(0) - 1)
    def _():
        # Single full cross-lane/sublane reduce, done once.
        out_ref[0, 0] = jnp.sum(acc_ref[...])


@jax.jit
def l1_loss(x, y, weight=1.0):
    assert x.shape == y.shape, "l1_loss requires matching shapes"
    n = x.size  # original element count (denominator of the mean)

    xf = x.reshape(-1)  # reshape of a contiguous array: free, no copy
    yf = y.reshape(-1)

    rem = n % LANE
    if rem:
        # Uncommon path: pad only up to the next lane multiple (|0 - 0| = 0).
        pad = LANE - rem
        xf = jnp.pad(xf, (0, pad))
        yf = jnp.pad(yf, (0, pad))
    rows = xf.size // LANE

    # Native sublane tile: 8 rows for 4-byte, 16 for 2-byte, 32 for 1-byte dtypes.
    sub = {4: SUBLANE, 2: 16, 1: 32}.get(jnp.dtype(x.dtype).itemsize, SUBLANE)
    tm = min(TM_MAX, _round_up(rows, sub))

    x2 = xf.reshape(rows, LANE)
    y2 = yf.reshape(rows, LANE)

    grid = (pl.cdiv(rows, tm),)
    kernel = functools.partial(_l1_sum_kernel, tm=tm, rows=rows)

    # TODO(synk): on v7x, split the reduction over the 2 TensorCores with a
    # leading size-2 "parallel" grid axis + (2,1) partial-sum output (no benefit
    # on v5e/v6e, which have a single TensorCore).
    total = pl.pallas_call(
        kernel,
        out_shape=jax.ShapeDtypeStruct((1, 1), jnp.float32),
        grid_spec=pltpu.PrefetchScalarGridSpec(
            num_scalar_prefetch=0,
            grid=grid,
            in_specs=[
                pl.BlockSpec((tm, LANE), lambda i: (i, 0)),
                pl.BlockSpec((tm, LANE), lambda i: (i, 0)),
            ],
            out_specs=pl.BlockSpec(
                (1, 1), lambda i: (0, 0), memory_space=pltpu.SMEM
            ),
            scratch_shapes=[pltpu.VMEM((SUBLANE, LANE), jnp.float32)],
        ),
        compiler_params=pltpu.CompilerParams(
            dimension_semantics=("arbitrary",),  # sequential reduction axis
        ),
    )(x2, y2)

    # Mean over the ORIGINAL element count, scaled by the (traced) weight.
    return jnp.asarray(weight, jnp.float32) * (total[0, 0] / jnp.float32(n))


if __name__ == "__main__":
    key = jax.random.PRNGKey(0)
    kx, ky = jax.random.split(key)
    # Small NCHW-like shapes consistent with an image-enhancement loss.
    x = jax.random.normal(kx, (2, 4, 16, 16), dtype=jnp.float32)
    y = jax.random.normal(ky, (2, 4, 16, 16), dtype=jnp.float32)

    weight = 1.0
    out = jax.block_until_ready(l1_loss(x, y, weight))

    # Reference check against plain-JAX L1 mean.
    ref = weight * jnp.mean(jnp.abs(x - y))
    assert jnp.allclose(out, ref, rtol=1e-5, atol=1e-6), (out, ref)

    print("KERNEL_OK")
</pallas_src>

<mosaic_0001>
module attributes {stable_mosaic.version = 11 : i64} {
  func.func @_l1_sum_kernel(%arg0: i32, %arg1: memref<16x128xf32, #tpu.memory_space<vmem>>, %arg2: memref<16x128xf32, #tpu.memory_space<vmem>>, %arg3: memref<1x1xf32, #tpu.memory_space<smem>>, %arg4: memref<8x128xf32, #tpu.memory_space<vmem>>) attributes {dimension_semantics = [#tpu.dimension_semantics<arbitrary>], iteration_bounds = array<i64: 1>, scalar_prefetch = 0 : i64, scratch_operands = 1 : i64, tpu.core_type = #tpu.core_type<tc>, window_params = [{transform_indices = @transform_0, window_bounds = array<i64: 16, 128>}, {transform_indices = @transform_1, window_bounds = array<i64: 16, 128>}, {transform_indices = @transform_2, window_bounds = array<i64: 1, 1>}]} {
    %c0_i32 = arith.constant 0 : i32
    %0 = arith.cmpi eq, %arg0, %c0_i32 : i32
    %1 = arith.extui %0 : i1 to i32
    %c0_i32_0 = arith.constant 0 : i32
    %2 = arith.cmpi ne, %1, %c0_i32_0 : i32
    scf.if %2 {
      %cst_10 = arith.constant 0.000000e+00 : f32
      %15 = vector.broadcast %cst_10 : f32 to vector<8x128xf32>
      %c0_11 = arith.constant 0 : index
      %c0_12 = arith.constant 0 : index
      %16 = vector.load %arg4[%c0_11, %c0_12] : memref<8x128xf32, #tpu.memory_space<vmem>>, vector<8x128xf32>
      tpu.vector_store %arg4[%c0_11, %c0_12], %15 {strides = array<i32>} : memref<8x128xf32, #tpu.memory_space<vmem>>, vector<8x128xf32>,
    } else {
    }
    %c0 = arith.constant 0 : index
    %c0_1 = arith.constant 0 : index
    %3 = vector.load %arg1[%c0, %c0_1] : memref<16x128xf32, #tpu.memory_space<vmem>>, vector<16x128xf32>
    %c0_2 = arith.constant 0 : index
    %c0_3 = arith.constant 0 : index
    %4 = vector.load %arg2[%c0_2, %c0_3] : memref<16x128xf32, #tpu.memory_space<vmem>>, vector<16x128xf32>
    %5 = arith.subf %3, %4 : vector<16x128xf32>
    %6 = math.absf %5 : vector<16x128xf32>
    %c0_4 = arith.constant 0 : index
    %c0_5 = arith.constant 0 : index
    %7 = vector.load %arg4[%c0_4, %c0_5] : memref<8x128xf32, #tpu.memory_space<vmem>>, vector<8x128xf32>
    %8 = vector.shape_cast %6 : vector<16x128xf32> to vector<2x8x128xf32>
    %cst = arith.constant dense<0.000000e+00> : vector<8x128xf32>
    %9 = vector.multi_reduction <add>, %8, %cst [0] : vector<2x8x128xf32> to vector<8x128xf32>
    %10 = arith.addf %7, %9 : vector<8x128xf32>
    %c0_6 = arith.constant 0 : index
    %c0_7 = arith.constant 0 : index
    %11 = vector.load %arg4[%c0_6, %c0_7] : memref<8x128xf32, #tpu.memory_space<vmem>>, vector<8x128xf32>
    tpu.vector_store %arg4[%c0_6, %c0_7], %10 {strides = array<i32>} : memref<8x128xf32, #tpu.memory_space<vmem>>, vector<8x128xf32>,
    %c0_i32_8 = arith.constant 0 : i32
    %12 = arith.cmpi eq, %arg0, %c0_i32_8 : i32
    %13 = arith.extui %12 : i1 to i32
    %c0_i32_9 = arith.constant 0 : i32
    %14 = arith.cmpi ne, %13, %c0_i32_9 : i32
    scf.if %14 {
      %c0_10 = arith.constant 0 : index
      %c0_11 = arith.constant 0 : index
      %15 = vector.load %arg4[%c0_10, %c0_11] : memref<8x128xf32, #tpu.memory_space<vmem>>, vector<8x128xf32>
      %16 = vector.shape_cast %15 : vector<8x128xf32> to vector<1x8x128xf32>
      %cst_12 = arith.constant dense<0.000000e+00> : vector<1xf32>
      %17 = vector.multi_reduction <add>, %16, %cst_12 [1, 2] : vector<1x8x128xf32> to vector<1xf32>
      %18 = vector.shape_cast %17 : vector<1xf32> to vector<1x1x1xf32>
      %19 = vector.extract %18[0, 0, 0] : f32 from vector<1x1x1xf32>
      %c0_13 = arith.constant 0 : index
      %c0_14 = arith.constant 0 : index
      %20 = memref.load %arg3[%c0_13, %c0_14] : memref<1x1xf32, #tpu.memory_space<smem>>
      memref.store %19, %arg3[%c0_13, %c0_14] : memref<1x1xf32, #tpu.memory_space<smem>>
    } else {
    }
    return
  }
  func.func @transform_0(%arg0: i32) -> (i32, i32) {
    %c0_i32 = arith.constant 0 : i32
    %c0_i32_0 = arith.constant 0 : i32
    return %arg0, %c0_i32 : i32, i32
  }
  func.func @transform_1(%arg0: i32) -> (i32, i32) {
    %c0_i32 = arith.constant 0 : i32
    %c0_i32_0 = arith.constant 0 : i32
    return %arg0, %c0_i32 : i32, i32
  }
  func.func @transform_2(%arg0: i32) -> (i32, i32) {
    %c0_i32 = arith.constant 0 : i32
    %c0_i32_0 = arith.constant 0 : i32
    %c0_i32_1 = arith.constant 0 : i32
    return %c0_i32, %c0_i32_0 : i32, i32
  }
}

</mosaic_0001>

<llo_original>
// kernel: l1_loss.1
$region0: #{l1_loss.1}
  #allocation0 [shape = 'u32[]', space=smem, size = 0x4, offset = 0x4, fixed_abs, tag = 'smem constant byte address 0x4 - core index']
  #allocation1 [shape = 'u32[72,128]{1,0:T(1,128)}', space=vmem, size = 0x9000, scoped, tag = 'internal scratch']
  #allocation2 [shape = 'f32[8,128]{1,0:T(8,128)}', space=vmem, size = 0x1000, scoped, tag = 'scratch operand']
  %s0 = inlined_call_operand.vmem [shape: f32[16,128], index: 0, kind: input, shape index: {}]
  %s1 = inlined_call_operand.vmem [shape: f32[16,128], index: 1, kind: input, shape index: {}]
  %s2 = inlined_call_operand.hbm [shape: f32[1,1], index: 2, kind: output, shape index: {}]
  %s3 = sld [smem:[#allocation0]]
  $region26: #{l1_loss.1} parent=0
    _
  %s5 = ssub.s32 1, %s3
  %s6 = scalar_select 0, %s5, %s3
  $region1: #{l1_loss.1} parent=0
    #allocation3 [shape = 'u8[512]{0}', space=smem, size = 0x200, scoped, tag = 'output window, operand 0, single buffered']
    #allocation4 [shape = 's32[1]{0}', space=sflag, size = 0x4, scoped, tag = 'scoped memory for l1_loss.1']
    %7 = vsyncpa [#allocation4], 0
    // Predicated region
    $region2: #{l1_loss.1} parent=1 // pred_check
      _
    $region3: #{l1_loss.1} parent=1 // pred_check_branch
      %9 = sbr.rel (0) target = $region5
    $region4: #{l1_loss.1} parent=1 // pred_region
      _
    $region5: #{l1_loss.1} parent=1 // pred_fallthru
      _
    // Predicated region
    $region6: #{l1_loss.1} parent=1 // pred_check
      _
    $region7: #{l1_loss.1} parent=1 // pred_check_branch
      %11 = sbr.rel (0) target = $region9
    $region8: #{l1_loss.1} parent=1 // pred_region
      _
    $region9: #{l1_loss.1} parent=1 // pred_fallthru
      _
    %p12 = scmp.eq.s32.totalorder 0, 0
    // Predicated region
    $region10: #{l1_loss.1} parent=1 // pred_check
      %p13 = pneg %p12
    $region11: #{l1_loss.1} parent=1 // pred_check_branch
      %15 = sbr.rel (%p13) target = $region13
    $region12: #{l1_loss.1} parent=1 // pred_region
      %16 = vst [vmem:[#allocation2] sm:$0xff] 0.0
    $region13: #{l1_loss.1} parent=1 // pred_fallthru
      _
    %v17 = vld [vmem:[%s0] sm:$0xff]
    %v18 = vld [vmem:[%s0 + $0x8] sm:$0xff]
    %v19 = vld [vmem:[%s1] sm:$0xff]
    %v20 = vld [vmem:[%s1 + $0x8] sm:$0xff]
    %v21 = vsub.f32 %v17, %v19
    %v22 = vsub.f32 %v18, %v20
    %v23 = vand.u32 2147483647, %v21
    %v24 = vand.u32 2147483647, %v22
    %v25 = vld [vmem:[#allocation2] sm:$0xff]
    %v26 = vadd.f32 %v23, %v24
    %v27 = vadd.f32 %v25, %v26
    %28 = vst [vmem:[#allocation2] sm:$0xff] %v27
    // Predicated region
    $region14: #{l1_loss.1} parent=1 // pred_check
      %p29 = pneg %p12
    $region15: #{l1_loss.1} parent=1 // pred_check_branch
      %31 = sbr.rel (%p29) target = $region17
    $region16: #{l1_loss.1} parent=1 // pred_region
      %v32 = vld [vmem:[#allocation2] sm:$0xff]
      %33 = vadd.xlane.f32.xlu0 %v32
      %v34 = vpop.xlane.xlu0 %33
      %v35 = vrot.slane %v34, 4
      %v36 = vadd.f32 %v34, %v35
      %v37 = vrot.slane %v36, 2
      %v38 = vadd.f32 %v36, %v37
      %v39 = vrot.slane %v38, 1
      %v40 = vadd.f32 %v38, %v39
      %s41 = vtos %v40
      %s42 = scalar_lea.smem [#allocation3], 0
      %43 = sst [smem:[%s42]] %s41
    $region17: #{l1_loss.1} parent=1 // pred_fallthru
      _
    // Predicated region
    $region18: #{l1_loss.1} parent=1 // pred_check
      _
    $region19: #{l1_loss.1} parent=1 // pred_check_branch
      %45 = sbr.rel (0) target = $region21
    $region20: #{l1_loss.1} parent=1 // pred_region
      %47 = vsyncadd [#allocation4], 0
      %s49 = sshll.u32 %s2, 4
      %s50 = int_to_ptr.hbm [resolvable:$true] %s49
      %52 = dma.smem_to_hbm [#allocation3], 16, %s50, [#allocation4]
    $region21: #{l1_loss.1} parent=1 // pred_fallthru
      _
    // Predicated region
    $region22: #{l1_loss.1} parent=1 // pred_check
      _
    $region23: #{l1_loss.1} parent=1 // pred_check_branch
      %54 = sbr.rel (0) target = $region25
    $region24: #{l1_loss.1} parent=1 // pred_region
      %56 = dma.done [#allocation4], 16
    $region25: #{l1_loss.1} parent=1 // pred_fallthru
      _
    %57 = sfence
    %58 = vsyncpa [#allocation4], 1

</llo_original>
